<compile_context>
chip_gen: v7x
topology: tpu7x:2x2x1
jax: 0.10.0
libtpu: 0.0.40
codegen_flags: <defaults>
</compile_context>

<pallas_src>
import functools

import jax
import jax.numpy as jnp
from jax.experimental import pallas as pl
from jax.experimental.pallas import tpu as pltpu


def _focal_loss_kernel(logits_ref, labels_ref, psum_ref, pcnt_ref, *,
                       hw, gamma, ignore_lb):
    t = pl.program_id(1)
    C = logits_ref.shape[1]
    lbl = labels_ref[0, 0].astype(jnp.int32)           # (tr, 128) pixel-dense
    tr = lbl.shape[0]

    def plane(c):                                      # one class plane, f32
        return logits_ref[0, c].astype(jnp.float32)    # (tr, 128)

    # numerically stable max over classes (C-1 dense VPU maxes)
    m = plane(0)
    for c in range(1, C):
        m = jnp.maximum(m, plane(c))

    # single pass: exp-sum over classes + one-hot pick of the label channel
    s = jnp.zeros_like(m)
    picked_z = jnp.zeros_like(m)
    picked_e = jnp.zeros_like(m)
    for c in range(C):
        zc = plane(c) - m
        ec = jnp.exp(zc)
        s = s + ec
        oh = lbl == c
        picked_z = jnp.where(oh, zc, picked_z)
        picked_e = jnp.where(oh, ec, picked_e)

    # label-channel softmax prob / log-prob and focal factor (all (tr, 128))
    p = picked_e / s                                   # exact division
    one_minus = jnp.maximum(1.0 - p, 0.0)
    g = float(gamma)
    if g.is_integer() and g >= 0.0:
        gi = int(g)
        factor = jnp.ones_like(one_minus) if gi == 0 else one_minus
        for _ in range(max(gi - 1, 0)):                # gamma=2 -> one VPU multiply
            factor = factor * one_minus
    else:
        factor = one_minus ** g                        # generic non-integer gamma
    log_p = picked_z - jnp.log(s)                      # log_softmax at label class
    per_px = factor * log_p

    # validity: not ignore_index AND inside the real (unpadded) image.
    # The last tile may read out-of-bounds rows (garbage); the select below
    # guarantees that inf/NaN from garbage logits cannot reach the sums.
    row = jax.lax.broadcasted_iota(jnp.int32, (tr, 128), 0) + t * tr
    lane = jax.lax.broadcasted_iota(jnp.int32, (tr, 128), 1)
    inside = (row * 128 + lane) < hw
    valid = (lbl != ignore_lb) & inside

    contrib = jnp.where(valid, -per_px, 0.0)
    vcnt = jnp.where(valid, 1.0, 0.0)

    total = jnp.sum(contrib)
    count = jnp.sum(vcnt)

    # per-tile partial outputs (splat the scalar into the lane-dense block);
    # no cross-step accumulation, so both grid axes can be "parallel".
    psum_ref[...] = jnp.zeros(psum_ref.shape, jnp.float32) + total
    pcnt_ref[...] = jnp.zeros(pcnt_ref.shape, jnp.float32) + count


def softmax_focal_loss(logits, labels, *, gamma=2.0, ignore_lb=255):
    """logits: (N, C, H, W) float, labels: (N, H, W) int. Returns scalar f32 loss."""
    N, C, H, W = logits.shape
    HW = H * W
    R = pl.cdiv(HW, 128)                # pixel "rows" of 128 lanes
    hw128 = R * 128

    if hw128 == HW:
        x = logits.reshape(N, C, R, 128)          # free reshape, stays NCHW order
        lab = labels.reshape(N, 1, R, 128)
    else:
        # rare path: H*W not lane-aligned; pad at most 127 pixels per image.
        # Padded pixels are masked out in-kernel via the pixel-index compare.
        pad = hw128 - HW
        x = jnp.pad(logits.reshape(N, C, HW), ((0, 0), (0, 0), (0, pad)))
        x = x.reshape(N, C, R, 128)
        lab = jnp.pad(labels.reshape(N, 1, HW), ((0, 0), (0, 0), (0, pad)))
        lab = lab.reshape(N, 1, R, 128)

    # ---- per-generation tile sizing (v7x: 64 MiB VMEM/TC, v5e/v6e: 128 MiB) ----
    try:
        vmem_cap = int(getattr(pltpu.get_tpu_info(), "vmem_capacity_bytes",
                               64 * 1024 * 1024))
    except Exception:
        vmem_cap = 64 * 1024 * 1024
    vmem_limit = int(min(max(vmem_cap // 2, 32 * 1024 * 1024), 96 * 1024 * 1024))

    in_bytes_row = 128 * (C * logits.dtype.itemsize + lab.dtype.itemsize)
    tmp_bytes_row = 128 * 4 * 12        # generous: ~12 live f32 (rows,128) planes
    per_row = 2 * in_bytes_row + tmp_bytes_row        # double-buffered inputs + temps
    tr_cap = max(8, ((vmem_limit // 2) // per_row) // 8 * 8)
    tr = R if R <= tr_cap else tr_cap   # tr == R may be non-multiple-of-8 (full dim)
    T = pl.cdiv(R, tr)
    if N == 1 and T == 1 and R >= 16:
        # batch 1: split the pixel axis so v7x megacore has two grid steps
        tr = max(8, (pl.cdiv(R, 2) + 7) // 8 * 8)
        T = pl.cdiv(R, tr)

    kernel = functools.partial(_focal_loss_kernel, hw=HW, gamma=float(gamma),
                               ignore_lb=int(ignore_lb))

    psum, pcnt = pl.pallas_call(
        kernel,
        out_shape=(jax.ShapeDtypeStruct((N, T, 8, 128), jnp.float32),
                   jax.ShapeDtypeStruct((N, T, 8, 128), jnp.float32)),
        grid_spec=pltpu.PrefetchScalarGridSpec(
            num_scalar_prefetch=0,
            grid=(N, T),
            in_specs=[
                pl.BlockSpec((1, C, tr, 128), lambda n, t: (n, 0, t, 0)),
                pl.BlockSpec((1, 1, tr, 128), lambda n, t: (n, 0, t, 0)),
            ],
            out_specs=[
                pl.BlockSpec((1, 1, 8, 128), lambda n, t: (n, t, 0, 0)),
                pl.BlockSpec((1, 1, 8, 128), lambda n, t: (n, t, 0, 0)),
            ],
        ),
        compiler_params=pltpu.CompilerParams(
            dimension_semantics=("parallel", "parallel"),
            vmem_limit_bytes=vmem_limit),
    )(x, lab)

    loss_sum = jnp.sum(psum[:, :, 0, 0])
    cnt = jnp.sum(pcnt[:, :, 0, 0])
    # NLLLoss(mean): sum over valid pixels / number of valid pixels (f32 scalar,
    # matching PyTorch; NaN if every pixel is ignore_index, same as PyTorch).
    return (loss_sum / cnt).astype(jnp.float32)


def _reference_loss(logits, labels, gamma=2.0, ignore_lb=255):
    # Pure-JAX reference of the PyTorch forward (for verification only).
    scores = jax.nn.softmax(logits, axis=1)
    factor = (1.0 - scores) ** gamma
    log_score = factor * jax.nn.log_softmax(logits, axis=1)   # (N, C, H, W)
    lbl = labels.astype(jnp.int32)
    valid = lbl != ignore_lb
    safe_lbl = jnp.where(valid, lbl, 0)
    picked = jnp.take_along_axis(log_score, safe_lbl[:, None, :, :], axis=1)[:, 0]
    per_px = jnp.where(valid, -picked, 0.0)
    return jnp.sum(per_px) / jnp.sum(valid.astype(jnp.float32))


if __name__ == "__main__":
    key = jax.random.PRNGKey(0)
    k1, k2 = jax.random.split(key)

    N, C, H, W = 2, 4, 16, 16
    logits = jax.random.normal(k1, (N, C, H, W), dtype=jnp.float32)
    labels = jax.random.randint(k2, (N, H, W), 0, C, dtype=jnp.int32)
    # sprinkle some ignore_index pixels
    labels = labels.at[0, 0, :4].set(255)
    labels = labels.at[1, 5, 7].set(255)

    loss = jax.block_until_ready(softmax_focal_loss(logits, labels))
    ref = jax.block_until_ready(_reference_loss(logits, labels))

    if not bool(jnp.allclose(loss, ref, rtol=1e-4, atol=1e-5)):
        raise AssertionError(f"mismatch: pallas={loss} ref={ref}")
    print("KERNEL_OK")
</pallas_src>

<mosaic_0001>
module attributes {stable_mosaic.version = 11 : i64} {
  func.func @_focal_loss_kernel(%arg0: i32, %arg1: i32, %arg2: memref<1x4x2x128xf32, #tpu.memory_space<vmem>>, %arg3: memref<1x1x2x128xi32, #tpu.memory_space<vmem>>, %arg4: memref<1x1x8x128xf32, #tpu.memory_space<vmem>>, %arg5: memref<1x1x8x128xf32, #tpu.memory_space<vmem>>) attributes {dimension_semantics = [#tpu.dimension_semantics<parallel>, #tpu.dimension_semantics<parallel>], iteration_bounds = array<i64: 2, 1>, scalar_prefetch = 0 : i64, scratch_operands = 0 : i64, tpu.core_type = #tpu.core_type<tc>, window_params = [{transform_indices = @transform_0, window_bounds = array<i64: 1, 4, 2, 128>}, {transform_indices = @transform_1, window_bounds = array<i64: 1, 1, 2, 128>}, {transform_indices = @transform_2, window_bounds = array<i64: 1, 1, 8, 128>}, {transform_indices = @transform_3, window_bounds = array<i64: 1, 1, 8, 128>}]} {
    %c0 = arith.constant 0 : index
    %c0_0 = arith.constant 0 : index
    %c0_1 = arith.constant 0 : index
    %c0_2 = arith.constant 0 : index
    %0 = vector.load %arg3[%c0, %c0_0, %c0_1, %c0_2] : memref<1x1x2x128xi32, #tpu.memory_space<vmem>>, vector<1x1x2x128xi32>
    %1 = vector.shape_cast %0 : vector<1x1x2x128xi32> to vector<2x128xi32>
    %c0_3 = arith.constant 0 : index
    %c0_4 = arith.constant 0 : index
    %c0_5 = arith.constant 0 : index
    %c0_6 = arith.constant 0 : index
    %2 = vector.load %arg2[%c0_3, %c0_4, %c0_5, %c0_6] : memref<1x4x2x128xf32, #tpu.memory_space<vmem>>, vector<1x1x2x128xf32>
    %3 = vector.shape_cast %2 : vector<1x1x2x128xf32> to vector<2x128xf32>
    %c0_7 = arith.constant 0 : index
    %c1 = arith.constant 1 : index
    %c0_8 = arith.constant 0 : index
    %c0_9 = arith.constant 0 : index
    %4 = vector.load %arg2[%c0_7, %c1, %c0_8, %c0_9] : memref<1x4x2x128xf32, #tpu.memory_space<vmem>>, vector<1x1x2x128xf32>
    %5 = vector.shape_cast %4 : vector<1x1x2x128xf32> to vector<2x128xf32>
    %6 = arith.maximumf %3, %5 : vector<2x128xf32>
    %c0_10 = arith.constant 0 : index
    %c2 = arith.constant 2 : index
    %c0_11 = arith.constant 0 : index
    %c0_12 = arith.constant 0 : index
    %7 = vector.load %arg2[%c0_10, %c2, %c0_11, %c0_12] : memref<1x4x2x128xf32, #tpu.memory_space<vmem>>, vector<1x1x2x128xf32>
    %8 = vector.shape_cast %7 : vector<1x1x2x128xf32> to vector<2x128xf32>
    %9 = arith.maximumf %6, %8 : vector<2x128xf32>
    %c0_13 = arith.constant 0 : index
    %c3 = arith.constant 3 : index
    %c0_14 = arith.constant 0 : index
    %c0_15 = arith.constant 0 : index
    %10 = vector.load %arg2[%c0_13, %c3, %c0_14, %c0_15] : memref<1x4x2x128xf32, #tpu.memory_space<vmem>>, vector<1x1x2x128xf32>
    %11 = vector.shape_cast %10 : vector<1x1x2x128xf32> to vector<2x128xf32>
    %12 = arith.maximumf %9, %11 : vector<2x128xf32>
    %cst = arith.constant 0.000000e+00 : f32
    %13 = vector.broadcast %cst : f32 to vector<2x128xf32>
    %cst_16 = arith.constant 0.000000e+00 : f32
    %14 = vector.broadcast %cst_16 : f32 to vector<2x128xf32>
    %cst_17 = arith.constant 0.000000e+00 : f32
    %15 = vector.broadcast %cst_17 : f32 to vector<2x128xf32>
    %c0_18 = arith.constant 0 : index
    %c0_19 = arith.constant 0 : index
    %c0_20 = arith.constant 0 : index
    %c0_21 = arith.constant 0 : index
    %16 = vector.load %arg2[%c0_18, %c0_19, %c0_20, %c0_21] : memref<1x4x2x128xf32, #tpu.memory_space<vmem>>, vector<1x1x2x128xf32>
    %17 = vector.shape_cast %16 : vector<1x1x2x128xf32> to vector<2x128xf32>
    %18 = arith.subf %17, %12 : vector<2x128xf32>
    %19 = math.exp %18 : vector<2x128xf32>
    %20 = arith.addf %13, %19 : vector<2x128xf32>
    %c0_i32 = arith.constant 0 : i32
    %21 = vector.broadcast %c0_i32 : i32 to vector<2x128xi32>
    %22 = arith.cmpi eq, %1, %21 : vector<2x128xi32>
    %23 = arith.select %22, %18, %14 : vector<2x128xi1>, vector<2x128xf32>
    %24 = arith.select %22, %19, %15 : vector<2x128xi1>, vector<2x128xf32>
    %c0_22 = arith.constant 0 : index
    %c1_23 = arith.constant 1 : index
    %c0_24 = arith.constant 0 : index
    %c0_25 = arith.constant 0 : index
    %25 = vector.load %arg2[%c0_22, %c1_23, %c0_24, %c0_25] : memref<1x4x2x128xf32, #tpu.memory_space<vmem>>, vector<1x1x2x128xf32>
    %26 = vector.shape_cast %25 : vector<1x1x2x128xf32> to vector<2x128xf32>
    %27 = arith.subf %26, %12 : vector<2x128xf32>
    %28 = math.exp %27 : vector<2x128xf32>
    %29 = arith.addf %20, %28 : vector<2x128xf32>
    %c1_i32 = arith.constant 1 : i32
    %30 = vector.broadcast %c1_i32 : i32 to vector<2x128xi32>
    %31 = arith.cmpi eq, %1, %30 : vector<2x128xi32>
    %32 = arith.select %31, %27, %23 : vector<2x128xi1>, vector<2x128xf32>
    %33 = arith.select %31, %28, %24 : vector<2x128xi1>, vector<2x128xf32>
    %c0_26 = arith.constant 0 : index
    %c2_27 = arith.constant 2 : index
    %c0_28 = arith.constant 0 : index
    %c0_29 = arith.constant 0 : index
    %34 = vector.load %arg2[%c0_26, %c2_27, %c0_28, %c0_29] : memref<1x4x2x128xf32, #tpu.memory_space<vmem>>, vector<1x1x2x128xf32>
    %35 = vector.shape_cast %34 : vector<1x1x2x128xf32> to vector<2x128xf32>
    %36 = arith.subf %35, %12 : vector<2x128xf32>
    %37 = math.exp %36 : vector<2x128xf32>
    %38 = arith.addf %29, %37 : vector<2x128xf32>
    %c2_i32 = arith.constant 2 : i32
    %39 = vector.broadcast %c2_i32 : i32 to vector<2x128xi32>
    %40 = arith.cmpi eq, %1, %39 : vector<2x128xi32>
    %41 = arith.select %40, %36, %32 : vector<2x128xi1>, vector<2x128xf32>
    %42 = arith.select %40, %37, %33 : vector<2x128xi1>, vector<2x128xf32>
    %c0_30 = arith.constant 0 : index
    %c3_31 = arith.constant 3 : index
    %c0_32 = arith.constant 0 : index
    %c0_33 = arith.constant 0 : index
    %43 = vector.load %arg2[%c0_30, %c3_31, %c0_32, %c0_33] : memref<1x4x2x128xf32, #tpu.memory_space<vmem>>, vector<1x1x2x128xf32>
    %44 = vector.shape_cast %43 : vector<1x1x2x128xf32> to vector<2x128xf32>
    %45 = arith.subf %44, %12 : vector<2x128xf32>
    %46 = math.exp %45 : vector<2x128xf32>
    %47 = arith.addf %38, %46 : vector<2x128xf32>
    %c3_i32 = arith.constant 3 : i32
    %48 = vector.broadcast %c3_i32 : i32 to vector<2x128xi32>
    %49 = arith.cmpi eq, %1, %48 : vector<2x128xi32>
    %50 = arith.select %49, %45, %41 : vector<2x128xi1>, vector<2x128xf32>
    %51 = arith.select %49, %46, %42 : vector<2x128xi1>, vector<2x128xf32>
    %52 = arith.divf %51, %47 : vector<2x128xf32>
    %cst_34 = arith.constant 1.000000e+00 : f32
    %53 = vector.broadcast %cst_34 : f32 to vector<2x128xf32>
    %54 = arith.subf %53, %52 : vector<2x128xf32>
    %cst_35 = arith.constant 0.000000e+00 : f32
    %55 = vector.broadcast %cst_35 : f32 to vector<2x128xf32>
    %56 = arith.maximumf %54, %55 : vector<2x128xf32>
    %57 = arith.mulf %56, %56 : vector<2x128xf32>
    %58 = math.log %47 : vector<2x128xf32>
    %59 = arith.subf %50, %58 : vector<2x128xf32>
    %60 = arith.mulf %57, %59 : vector<2x128xf32>
    %61 = tpu.iota {dimensions = array<i32: 0>} : vector<2x128xi32>
    %c2_i32_36 = arith.constant 2 : i32
    %62 = arith.muli %arg1, %c2_i32_36 : i32
    %63 = vector.broadcast %62 : i32 to vector<2x128xi32>
    %64 = arith.addi %61, %63 : vector<2x128xi32>
    %65 = tpu.iota {dimensions = array<i32: 1>} : vector<2x128xi32>
    %c128_i32 = arith.constant 128 : i32
    %66 = vector.broadcast %c128_i32 : i32 to vector<2x128xi32>
    %67 = arith.muli %64, %66 : vector<2x128xi32>
    %68 = arith.addi %67, %65 : vector<2x128xi32>
    %c256_i32 = arith.constant 256 : i32
    %69 = vector.broadcast %c256_i32 : i32 to vector<2x128xi32>
    %70 = arith.cmpi slt, %68, %69 : vector<2x128xi32>
    %c255_i32 = arith.constant 255 : i32
    %71 = vector.broadcast %c255_i32 : i32 to vector<2x128xi32>
    %72 = arith.cmpi ne, %1, %71 : vector<2x128xi32>
    %73 = arith.andi %72, %70 : vector<2x128xi1>
    %cst_37 = arith.constant 0.000000e+00 : f32
    %74 = vector.broadcast %cst_37 : f32 to vector<2x128xf32>
    %75 = arith.subf %74, %60 : vector<2x128xf32>
    %cst_38 = arith.constant 0.000000e+00 : f32
    %76 = vector.broadcast %cst_38 : f32 to vector<2x128xf32>
    %77 = arith.select %73, %75, %76 : vector<2x128xi1>, vector<2x128xf32>
    %cst_39 = arith.constant 1.000000e+00 : f32
    %cst_40 = arith.constant 0.000000e+00 : f32
    %78 = vector.broadcast %cst_39 : f32 to vector<2x128xf32>
    %79 = vector.broadcast %cst_40 : f32 to vector<2x128xf32>
    %80 = arith.select %73, %78, %79 : vector<2x128xi1>, vector<2x128xf32>
    %81 = vector.shape_cast %77 : vector<2x128xf32> to vector<1x2x128xf32>
    %cst_41 = arith.constant dense<0.000000e+00> : vector<1xf32>
    %82 = vector.multi_reduction <add>, %81, %cst_41 [1, 2] : vector<1x2x128xf32> to vector<1xf32>
    %83 = vector.shape_cast %82 : vector<1xf32> to vector<1x1x1xf32>
    %84 = vector.extract %83[0, 0, 0] : f32 from vector<1x1x1xf32>
    %85 = vector.shape_cast %80 : vector<2x128xf32> to vector<1x2x128xf32>
    %cst_42 = arith.constant dense<0.000000e+00> : vector<1xf32>
    %86 = vector.multi_reduction <add>, %85, %cst_42 [1, 2] : vector<1x2x128xf32> to vector<1xf32>
    %87 = vector.shape_cast %86 : vector<1xf32> to vector<1x1x1xf32>
    %88 = vector.extract %87[0, 0, 0] : f32 from vector<1x1x1xf32>
    %cst_43 = arith.constant 0.000000e+00 : f32
    %89 = vector.broadcast %cst_43 : f32 to vector<1x1x8x128xf32>
    %90 = vector.broadcast %84 : f32 to vector<1x1x8x128xf32>
    %91 = arith.addf %89, %90 : vector<1x1x8x128xf32>
    %c0_44 = arith.constant 0 : index
    %c0_45 = arith.constant 0 : index
    %c0_46 = arith.constant 0 : index
    %c0_47 = arith.constant 0 : index
    %92 = vector.load %arg4[%c0_44, %c0_45, %c0_46, %c0_47] : memref<1x1x8x128xf32, #tpu.memory_space<vmem>>, vector<1x1x8x128xf32>
    tpu.vector_store %arg4[%c0_44, %c0_45, %c0_46, %c0_47], %91 {strides = array<i32>} : memref<1x1x8x128xf32, #tpu.memory_space<vmem>>, vector<1x1x8x128xf32>,
    %cst_48 = arith.constant 0.000000e+00 : f32
    %93 = vector.broadcast %cst_48 : f32 to vector<1x1x8x128xf32>
    %94 = vector.broadcast %88 : f32 to vector<1x1x8x128xf32>
    %95 = arith.addf %93, %94 : vector<1x1x8x128xf32>
    %c0_49 = arith.constant 0 : index
    %c0_50 = arith.constant 0 : index
    %c0_51 = arith.constant 0 : index
    %c0_52 = arith.constant 0 : index
    %96 = vector.load %arg5[%c0_49, %c0_50, %c0_51, %c0_52] : memref<1x1x8x128xf32, #tpu.memory_space<vmem>>, vector<1x1x8x128xf32>
    tpu.vector_store %arg5[%c0_49, %c0_50, %c0_51, %c0_52], %95 {strides = array<i32>} : memref<1x1x8x128xf32, #tpu.memory_space<vmem>>, vector<1x1x8x128xf32>,
    return
  }
  func.func @transform_0(%arg0: i32, %arg1: i32) -> (i32, i32, i32, i32) {
    %c0_i32 = arith.constant 0 : i32
    %c0_i32_0 = arith.constant 0 : i32
    %c0_i32_1 = arith.constant 0 : i32
    return %arg0, %c0_i32, %arg1, %c0_i32_0 : i32, i32, i32, i32
  }
  func.func @transform_1(%arg0: i32, %arg1: i32) -> (i32, i32, i32, i32) {
    %c0_i32 = arith.constant 0 : i32
    %c0_i32_0 = arith.constant 0 : i32
    %c0_i32_1 = arith.constant 0 : i32
    return %arg0, %c0_i32, %arg1, %c0_i32_0 : i32, i32, i32, i32
  }
  func.func @transform_2(%arg0: i32, %arg1: i32) -> (i32, i32, i32, i32) {
    %c0_i32 = arith.constant 0 : i32
    %c0_i32_0 = arith.constant 0 : i32
    %c0_i32_1 = arith.constant 0 : i32
    return %arg0, %arg1, %c0_i32, %c0_i32_0 : i32, i32, i32, i32
  }
  func.func @transform_3(%arg0: i32, %arg1: i32) -> (i32, i32, i32, i32) {
    %c0_i32 = arith.constant 0 : i32
    %c0_i32_0 = arith.constant 0 : i32
    %c0_i32_1 = arith.constant 0 : i32
    return %arg0, %arg1, %c0_i32, %c0_i32_0 : i32, i32, i32, i32
  }
}

</mosaic_0001>

<llo_original>
// kernel: tpu_custom_call.1
$region0: #{tpu_custom_call.1}
  #allocation0 [shape = 'u32[]', space=smem, size = 0x4, offset = 0x4, fixed_abs, tag = 'smem constant byte address 0x4 - core index']
  #allocation1 [shape = 'u32[144,128]{1,0:T(1,128)}', space=vmem, size = 0x12000, scoped, tag = 'internal scratch']
  %s0 = inlined_call_operand.hbm [shape: f32[2,4,2,128], index: 0, kind: input, shape index: {}]
  %s1 = inlined_call_operand.hbm [shape: s32[2,1,2,128], index: 1, kind: input, shape index: {}]
  %s2 = inlined_call_operand.hbm [shape: f32[2,1,8,128], index: 2, kind: output, shape index: {0}]
  %s3 = inlined_call_operand.hbm [shape: f32[2,1,8,128], index: 3, kind: output, shape index: {1}]
  %4 = xla_tuple %s2, %s3
  %s5 = sld [smem:[#allocation0]]
  $region57: #{tpu_custom_call.1} parent=0
    _
  %s7 = ssub.s32 1, %s5
  %s8 = scalar_select 0, %s7, %s5
  $region1: #{tpu_custom_call.1} parent=0
    #allocation2 [shape = 'u8[8192]{0}', space=vmem, size = 0x2000, scoped, tag = 'input window, operand 0']
    #allocation3 [shape = 's32[2]{0}', space=sflag, size = 0x8, scoped, tag = 'scoped memory for tpu_custom_call.1']
    #allocation4 [shape = 's32[2]{0}', space=sflag, size = 0x8, scoped, tag = 'scoped memory for tpu_custom_call.1']
    #allocation5 [shape = 'u8[2048]{0}', space=vmem, size = 0x800, scoped, tag = 'input window, operand 1']
    #allocation6 [shape = 's32[2]{0}', space=sflag, size = 0x8, scoped, tag = 'scoped memory for tpu_custom_call.1']
    #allocation7 [shape = 'u8[8192]{0}', space=vmem, size = 0x2000, scoped, tag = 'output window, operand 0']
    #allocation8 [shape = 'u8[8192]{0}', space=vmem, size = 0x2000, scoped, tag = 'output window, operand 1']
    #allocation9 [shape = 's32[2]{0}', space=sflag, size = 0x8, scoped, tag = 'scoped memory for tpu_custom_call.1']
    %9 = vsyncpa [#allocation3], 0
    %s10 = scalar_lea.sflag [#allocation3], 1
    %11 = vsyncpa %s10, 0
    %12 = vsyncpa [#allocation6], 0
    %s13 = scalar_lea.sflag [#allocation6], 1
    %14 = vsyncpa %s13, 0
    %15 = vsyncpa [#allocation4], 0
    %s16 = scalar_lea.sflag [#allocation4], 1
    %17 = vsyncpa %s16, 0
    %18 = vsyncpa [#allocation9], 0
    %s19 = scalar_lea.sflag [#allocation9], 1
    %20 = vsyncpa %s19, 0
    loop: start=0, step=1, limit=4
    $region2: #{tpu_custom_call.1} parent=1 // loop_pre_header
      _
    $region3: #{tpu_custom_call.1} parent=1 // loop_header
      %s22 = sphi 0, %s26
      %p23 = scmp.ge.s32.totalorder %s22, 4
      %s29 = sphi 0, %s41
      %s30 = sphi 0, %s37
      %s31 = sphi 0, %s29
      %s32 = sphi 0, %s30
      %s33 = sphi 0, %s31
      %s34 = sphi 0, %s32
      %s46 = sphi 0, %s48
      %s49 = sphi 0, %s46
      %s50 = sphi 0, %s49
      %s66 = sphi 0, %s50
      %s74 = sphi 0, %s76
      %s77 = sphi 0, %s74
      %s78 = sphi 0, %s77
      %s94 = sphi 0, %s78
      %s102 = sphi 0, %s104
      %s105 = sphi 0, %s102
      %s106 = sphi 0, %s105
      %s122 = sphi 0, %s106
      %s130 = sphi 0, %s132
      %s133 = sphi 0, %s130
      %s134 = sphi 0, %s133
      %s150 = sphi 0, %s134
    $region4: #{tpu_custom_call.1} parent=1 // loop_header_branch
      %25 = sbr.rel (%p23) target = $region8
    $region5: #{tpu_custom_call.1} parent=1 // loop_body
      %s27 = ssub.s32 %s22, 1
      %s28 = ssub.s32 %s22, 2
      %s35 = sadd.s32 1, %s30
      %p36 = scmp.ge.s32.totalorder %s35, 1
      %s37 = scalar_select %p36, 0, %s35
      %s38 = sadd.s32 1, %s29
      %s39 = scalar_select %p36, %s38, %s29
      %p40 = scmp.ge.s32.totalorder %s39, 2
      %s41 = scalar_select %p40, 0, %s39
      %s42 = ssub.s32 %s29, %s41
      %s43 = ssub.s32 %s30, %s37
      %s44 = sor.u32 %s42, %s43
      %p45 = scmp.eq.s32.totalorder %s44, 0
      %s47 = sadd.s32 %s46, 1
      %s48 = scalar_select %p45, %s46, %s47
      %p51 = pneg %p45
      %p52 = scmp.eq.s32.totalorder %s22, 1
      %p53 = por %p51, %p52
      %p54 = scmp.ne.s32.totalorder %s46, %s49
      %p55 = scmp.eq.s32.totalorder %s22, 0
      %p56 = por %p54, %p55
      %p57 = scmp.ne.s32.totalorder %s46, %s49
      %p58 = scmp.eq.s32.totalorder %s27, 1
      %p59 = por %p57, %p58
      %p60 = scmp.ne.s32.totalorder %s49, %s50
      %p61 = scmp.eq.s32.totalorder %s27, 0
      %p62 = por %p60, %p61
      %p63 = scmp.ne.s32.totalorder %s49, %s50
      %p64 = scmp.eq.s32.totalorder %s28, 1
      %p65 = por %p63, %p64
      %p67 = scmp.ne.s32.totalorder %s50, %s66
      %p68 = scmp.eq.s32.totalorder %s28, 0
      %p69 = por %p67, %p68
      %s70 = ssub.s32 %s29, %s41
      %s71 = ssub.s32 %s30, %s37
      %s72 = sor.u32 %s70, %s71
      %p73 = scmp.eq.s32.totalorder %s72, 0
      %s75 = sadd.s32 %s74, 1
      %s76 = scalar_select %p73, %s74, %s75
      %p79 = pneg %p73
      %p80 = scmp.eq.s32.totalorder %s22, 1
      %p81 = por %p79, %p80
      %p82 = scmp.ne.s32.totalorder %s74, %s77
      %p83 = scmp.eq.s32.totalorder %s22, 0
      %p84 = por %p82, %p83
      %p85 = scmp.ne.s32.totalorder %s74, %s77
      %p86 = scmp.eq.s32.totalorder %s27, 1
      %p87 = por %p85, %p86
      %p88 = scmp.ne.s32.totalorder %s77, %s78
      %p89 = scmp.eq.s32.totalorder %s27, 0
      %p90 = por %p88, %p89
      %p91 = scmp.ne.s32.totalorder %s77, %s78
      %p92 = scmp.eq.s32.totalorder %s28, 1
      %p93 = por %p91, %p92
      %p95 = scmp.ne.s32.totalorder %s78, %s94
      %p96 = scmp.eq.s32.totalorder %s28, 0
      %p97 = por %p95, %p96
      %s98 = ssub.s32 %s29, %s41
      %s99 = ssub.s32 %s30, %s37
      %s100 = sor.u32 %s98, %s99
      %p101 = scmp.eq.s32.totalorder %s100, 0
      %s103 = sadd.s32 %s102, 1
      %s104 = scalar_select %p101, %s102, %s103
      %p107 = pneg %p101
      %p108 = scmp.eq.s32.totalorder %s22, 1
      %p109 = por %p107, %p108
      %p110 = scmp.ne.s32.totalorder %s102, %s105
      %p111 = scmp.eq.s32.totalorder %s22, 0
      %p112 = por %p110, %p111
      %p113 = scmp.ne.s32.totalorder %s102, %s105
      %p114 = scmp.eq.s32.totalorder %s27, 1
      %p115 = por %p113, %p114
      %p116 = scmp.ne.s32.totalorder %s105, %s106
      %p117 = scmp.eq.s32.totalorder %s27, 0
      %p118 = por %p116, %p117
      %p119 = scmp.ne.s32.totalorder %s105, %s106
      %p120 = scmp.eq.s32.totalorder %s28, 1
      %p121 = por %p119, %p120
      %p123 = scmp.ne.s32.totalorder %s106, %s122
      %p124 = scmp.eq.s32.totalorder %s28, 0
      %p125 = por %p123, %p124
      %s126 = ssub.s32 %s29, %s41
      %s127 = ssub.s32 %s30, %s37
      %s128 = sor.u32 %s126, %s127
      %p129 = scmp.eq.s32.totalorder %s128, 0
      %s131 = sadd.s32 %s130, 1
      %s132 = scalar_select %p129, %s130, %s131
      %p135 = pneg %p129
      %p136 = scmp.eq.s32.totalorder %s22, 1
      %p137 = por %p135, %p136
      %p138 = scmp.ne.s32.totalorder %s130, %s133
      %p139 = scmp.eq.s32.totalorder %s22, 0
      %p140 = por %p138, %p139
      %p141 = scmp.ne.s32.totalorder %s130, %s133
      %p142 = scmp.eq.s32.totalorder %s27, 1
      %p143 = por %p141, %p142
      %p144 = scmp.ne.s32.totalorder %s133, %s134
      %p145 = scmp.eq.s32.totalorder %s27, 0
      %p146 = por %p144, %p145
      %p147 = scmp.ne.s32.totalorder %s133, %s134
      %p148 = scmp.eq.s32.totalorder %s28, 1
      %p149 = por %p147, %p148
      %p151 = scmp.ne.s32.totalorder %s134, %s150
      %p152 = scmp.eq.s32.totalorder %s28, 0
      %p153 = por %p151, %p152
      %p154 = scmp.le.s32.totalorder 1, %s22
      %p155 = scmp.lt.s32.totalorder %s22, 3
      %p156 = pnand %p154, %p155
      %p157 = pneg %p156
      // Predicated region
      $region9: #{tpu_custom_call.1} parent=5 // pred_check
        _
      $region10: #{tpu_custom_call.1} parent=5 // pred_check_branch
        %159 = sbr.rel (%p156) target = $region12
      $region11: #{tpu_custom_call.1} parent=5 // pred_region
        %s160 = ssub.s32 %s22, 1
      $region12: #{tpu_custom_call.1} parent=5 // pred_fallthru
        _
      %p161 = scmp.lt.s32.totalorder %s22, 2
      // Predicated region
      $region13: #{tpu_custom_call.1} parent=5 // pred_check
        %p162 = pneg %p161
      $region14: #{tpu_custom_call.1} parent=5 // pred_check_branch
        %164 = sbr.rel (%p162) target = $region16
      $region15: #{tpu_custom_call.1} parent=5 // pred_region
        // Predicated region
        $region17: #{tpu_custom_call.1} parent=15 // pred_check
          %p165 = pneg %p56
        $region18: #{tpu_custom_call.1} parent=15 // pred_check_branch
          %167 = sbr.rel (%p165) target = $region20
        $region19: #{tpu_custom_call.1} parent=15 // pred_region
          %s168 = sand.u32 %s46, 1
          %s169 = scalar_lea.sflag [#allocation3], %s168
          %s170 = sand.u32 %s46, 1
          %s171 = smul.addr %s170, 8
          %s172 = scalar_lea.vmem [#allocation2], %s171
          %s174 = ssub.s32 128, 128
          %175 = vsyncadd %s169, %s174
          %s176 = smul.addr %s29, 4
          %s177 = sadd.s32 %s30, %s176
          %s178 = smul.addr %s177, 32
          %s179 = scalar_lea.hbm %s0, %s178
          %s180 = sshll.u32 %s172, 4
          %s181 = int_to_ptr.vmem [resolvable:$true] %s180
          %186 = dma.hbm_to_vmem [thread:$0]  %s179, 128, %s181, %s169, 32, 32, 2
        $region20: #{tpu_custom_call.1} parent=15 // pred_fallthru
          _
        // Predicated region
        $region21: #{tpu_custom_call.1} parent=15 // pred_check
          %p187 = pneg %p84
        $region22: #{tpu_custom_call.1} parent=15 // pred_check_branch
          %189 = sbr.rel (%p187) target = $region24
        $region23: #{tpu_custom_call.1} parent=15 // pred_region
          %s190 = sand.u32 %s74, 1
          %s191 = scalar_lea.sflag [#allocation6], %s190
          %s192 = sand.u32 %s74, 1
          %s193 = smul.addr %s192, 2
          %s194 = scalar_lea.vmem [#allocation5], %s193
          %s196 = ssub.s32 32, 32
          %197 = vsyncadd %s191, %s196
          %s198 = sadd.s32 %s30, %s29
          %s199 = smul.addr %s198, 32
          %s200 = scalar_lea.hbm %s1, %s199
          %s202 = sshll.u32 %s194, 4
          %s203 = int_to_ptr.vmem [resolvable:$true] %s202
          %205 = dma.hbm_to_vmem [thread:$0]  %s200, 32, %s203, %s191
        $region24: #{tpu_custom_call.1} parent=15 // pred_fallthru
          _
      $region16: #{tpu_custom_call.1} parent=5 // pred_fallthru
        _
      %p206 = scmp.le.s32.totalorder 1, %s22
      %p207 = scmp.lt.s32.totalorder %s22, 3
      %p208 = pnand %p206, %p207
      %p209 = pneg %p208
      // Predicated region
      $region25: #{tpu_custom_call.1} parent=5 // pred_check
        _
      $region26: #{tpu_custom_call.1} parent=5 // pred_check_branch
        %211 = sbr.rel (%p208) target = $region28
      $region27: #{tpu_custom_call.1} parent=5 // pred_region
        %s212 = ssub.s32 %s22, 1
        %s213 = sand.u32 %s49, 1
        %s214 = scalar_lea.sflag [#allocation3], %s213
        %s215 = sand.u32 %s49, 1
        %s216 = smul.addr %s215, 8
        %s217 = scalar_lea.vmem [#allocation2], %s216
        // Predicated region
        $region29: #{tpu_custom_call.1} parent=27 // pred_check
          %p218 = pneg %p62
        $region30: #{tpu_custom_call.1} parent=27 // pred_check_branch
          %220 = sbr.rel (%p218) target = $region32
        $region31: #{tpu_custom_call.1} parent=27 // pred_region
          %221 = dma.done %s214, 128
        $region32: #{tpu_custom_call.1} parent=27 // pred_fallthru
          _
        %s222 = sand.u32 %s77, 1
        %s223 = scalar_lea.sflag [#allocation6], %s222
        %s224 = sand.u32 %s77, 1
        %s225 = smul.addr %s224, 2
        %s226 = scalar_lea.vmem [#allocation5], %s225
        // Predicated region
        $region33: #{tpu_custom_call.1} parent=27 // pred_check
          %p227 = pneg %p90
        $region34: #{tpu_custom_call.1} parent=27 // pred_check_branch
          %229 = sbr.rel (%p227) target = $region36
        $region35: #{tpu_custom_call.1} parent=27 // pred_region
          %230 = dma.done %s223, 32
        $region36: #{tpu_custom_call.1} parent=27 // pred_fallthru
          _
        %s231 = sand.u32 %s49, 1
        %s232 = scalar_lea.sflag [#allocation3], %s231
        %s233 = sand.u32 %s49, 1
        %s234 = smul.addr %s233, 8
        %s235 = scalar_lea.vmem [#allocation2], %s234
        %p236 = pneg %p62
        %p237 = pneg %p59
        %s238 = sand.u32 %s77, 1
        %s239 = scalar_lea.sflag [#allocation6], %s238
        %s240 = sand.u32 %s77, 1
        %s241 = smul.addr %s240, 2
        %s242 = scalar_lea.vmem [#allocation5], %s241
        %p243 = pneg %p90
        %p244 = pneg %p87
        %p245 = pneg %p118
        %p246 = pneg %p115
        %s247 = sand.u32 %s105, 1
        %s248 = scalar_lea.sflag [#allocation4], %s247
        %s249 = sand.u32 %s105, 1
        %s250 = smul.addr %s249, 8
        %s251 = scalar_lea.vmem [#allocation7], %s250
        %p252 = pneg %p146
        %p253 = pneg %p143
        %s254 = sand.u32 %s133, 1
        %s255 = scalar_lea.sflag [#allocation9], %s254
        %s256 = sand.u32 %s133, 1
        %s257 = smul.addr %s256, 8
        %s258 = scalar_lea.vmem [#allocation8], %s257
        %v259 = vld [vmem:[%s226] sm:$0x3]
        %v260 = vld [vmem:[%s217] sm:$0x3]
        %s261 = scalar_lea.vmem %s217, 2 [#allocation2]
        %v262 = vld [vmem:[%s261] sm:$0x3]
        %v263 = vmax.f32 %v260, %v262
        %s264 = scalar_lea.vmem %s217, 4 [#allocation2]
        %v265 = vld [vmem:[%s264] sm:$0x3]
        %v266 = vmax.f32 %v263, %v265
        %s267 = scalar_lea.vmem %s217, 6 [#allocation2]
        %v268 = vld [vmem:[%s267] sm:$0x3]
        %v269 = vmax.f32 %v266, %v268
        %v270 = vsub.f32 %v260, %v269
        %v271 = vmul.f32 %v270, 1.442695
        %v272 = vpow.pop %v271
        %v273 = vadd.f32 %v272, 0.0
        %vm274 = vcmp.eq.s32.totalorder %v259, 0
        %v275 = vsel %vm274, %v270, 0.0
        %v276 = vsel %vm274, %v272, 0.0
        %v277 = vsub.f32 %v262, %v269
        %v278 = vmul.f32 %v277, 1.442695
        %v279 = vpow.pop %v278
        %v280 = vadd.f32 %v273, %v279
        %vm281 = vcmp.eq.s32.totalorder %v259, 1
        %v282 = vsel %vm281, %v277, %v275
        %v283 = vsel %vm281, %v279, %v276
        %v284 = vsub.f32 %v265, %v269
        %v285 = vmul.f32 %v284, 1.442695
        %v286 = vpow.pop %v285
        %v287 = vadd.f32 %v280, %v286
        %vm288 = vcmp.eq.s32.totalorder %v259, 2
        %v289 = vsel %vm288, %v284, %v282
        %v290 = vsel %vm288, %v286, %v283
        %v291 = vsub.f32 %v268, %v269
        %v292 = vmul.f32 %v291, 1.442695
        %v293 = vpow.pop %v292
        %v294 = vadd.f32 %v287, %v293
        %vm295 = vcmp.eq.s32.totalorder %v259, 3
        %v296 = vsel %vm295, %v291, %v289
        %v297 = vsel %vm295, %v293, %v290
        %v298 = vrcp.pop %v294
        %v299 = vmul.f32 %v297, %v298
        %v300 = vsub.f32 1.0, %v299
        %v301 = vmax.f32 %v300, 0.0
        %v302 = vmul.f32 %v301, %v301
        %v303 = vlog2.pop %v294
        %v304 = vmul.f32 %v303, 0.6931472
        %v305 = vsub.f32 %v296, %v304
        %v306 = vmul.f32 %v302, %v305
        %v307 = vlaneseq
        %v308 = vshrl.u32 %v307, 7
        %s309 = smul.u32 %s32, 2
        %v310 = vstv %s309
        %v311 = vadd.s32 %v308, %v310
        %v312 = vlaneseq
        %v313 = vand.u32 %v312, 127
        %v314 = vmul.u32 %v311, 128
        %v315 = vadd.s32 %v314, %v313
        %vm316 = vcmp.lt.s32.totalorder %v315, 256
        %vm317 = vcmp.ne.s32.totalorder %v259, 255
        %vm318 = vmand %vm317, %vm316
        %v319 = vsub.f32 0.0, %v306
        %v320 = vsel %vm318, %v319, 0.0
        %v321 = vsel %vm318, 1.0, 0.0
        %vm322 = vcmask 1041408
        %v323 = vsel %vm322, %v320, 0.0
        %324 = vadd.xlane.f32.xlu0 %v323
        %v325 = vpop.xlane.xlu0 %324
        %v326 = vrot.slane %v325, 4
        %v327 = vadd.f32 %v325, %v326
        %v328 = vrot.slane %v327, 2
        %v329 = vadd.f32 %v327, %v328
        %v330 = vrot.slane %v329, 1
        %v331 = vadd.f32 %v329, %v330
        %s332 = vtos %v331
        %v333 = vsel %vm322, %v321, 0.0
        %334 = vadd.xlane.f32.xlu0 %v333
        %v335 = vpop.xlane.xlu0 %334
        %v336 = vrot.slane %v335, 4
        %v337 = vadd.f32 %v335, %v336
        %v338 = vrot.slane %v337, 2
        %v339 = vadd.f32 %v337, %v338
        %v340 = vrot.slane %v339, 1
        %v341 = vadd.f32 %v339, %v340
        %s342 = vtos %v341
        %v343 = vstv %s332
        %v344 = vadd.f32 %v343, 0.0
        %345 = vst [vmem:[%s251] sm:$0xff] %v344
        %v346 = vstv %s342
        %v347 = vadd.f32 %v346, 0.0
        %348 = vst [vmem:[%s258] sm:$0xff] %v347
        %s349 = sand.u32 %s105, 1
        %s350 = scalar_lea.sflag [#allocation4], %s349
        %s351 = sand.u32 %s105, 1
        %s352 = smul.addr %s351, 8
        %s353 = scalar_lea.vmem [#allocation7], %s352
        %s354 = sand.u32 %s133, 1
        %s355 = scalar_lea.sflag [#allocation9], %s354
        %s356 = sand.u32 %s133, 1
        %s357 = smul.addr %s356, 8
        %s358 = scalar_lea.vmem [#allocation8], %s357
        // Predicated region
        $region37: #{tpu_custom_call.1} parent=27 // pred_check
          %p359 = pneg %p115
        $region38: #{tpu_custom_call.1} parent=27 // pred_check_branch
          %361 = sbr.rel (%p359) target = $region40
        $region39: #{tpu_custom_call.1} parent=27 // pred_region
          %s363 = ssub.s32 128, 128
          %364 = vsyncadd %s350, %s363
          %s365 = sadd.s32 %s32, %s31
          %s366 = smul.addr %s365, 128
          %s367 = scalar_lea.hbm %s2, %s366
          %s369 = sshll.u32 %s353, 4
          %s370 = int_to_ptr.vmem [resolvable:$true] %s369
          %372 = dma.vmem_to_hbm [thread:$0]  %s370, 128, %s367, %s350
        $region40: #{tpu_custom_call.1} parent=27 // pred_fallthru
          _
        // Predicated region
        $region41: #{tpu_custom_call.1} parent=27 // pred_check
          %p373 = pneg %p143
        $region42: #{tpu_custom_call.1} parent=27 // pred_check_branch
          %375 = sbr.rel (%p373) target = $region44
        $region43: #{tpu_custom_call.1} parent=27 // pred_region
          %s377 = ssub.s32 128, 128
          %378 = vsyncadd %s355, %s377
          %s379 = sadd.s32 %s32, %s31
          %s380 = smul.addr %s379, 128
          %s381 = scalar_lea.hbm %s3, %s380
          %s383 = sshll.u32 %s358, 4
          %s384 = int_to_ptr.vmem [resolvable:$true] %s383
          %386 = dma.vmem_to_hbm [thread:$0]  %s384, 128, %s381, %s355
        $region44: #{tpu_custom_call.1} parent=27 // pred_fallthru
          _
      $region28: #{tpu_custom_call.1} parent=5 // pred_fallthru
        _
      %p387 = scmp.le.s32.totalorder 2, %s22
      // Predicated region
      $region45: #{tpu_custom_call.1} parent=5 // pred_check
        %p388 = pneg %p387
      $region46: #{tpu_custom_call.1} parent=5 // pred_check_branch
        %390 = sbr.rel (%p388) target = $region48
      $region47: #{tpu_custom_call.1} parent=5 // pred_region
        %s391 = ssub.s32 %s22, 2
        // Predicated region
        $region49: #{tpu_custom_call.1} parent=47 // pred_check
          %p392 = pneg %p121
        $region50: #{tpu_custom_call.1} parent=47 // pred_check_branch
          %394 = sbr.rel (%p392) target = $region52
        $region51: #{tpu_custom_call.1} parent=47 // pred_region
          %s395 = sand.u32 %s106, 1
          %s396 = scalar_lea.sflag [#allocation4], %s395
          %s397 = sand.u32 %s106, 1
          %s398 = smul.addr %s397, 8
          %s399 = scalar_lea.vmem [#allocation7], %s398
          %400 = dma.done %s396, 128
        $region52: #{tpu_custom_call.1} parent=47 // pred_fallthru
          _
        // Predicated region
        $region53: #{tpu_custom_call.1} parent=47 // pred_check
          %p401 = pneg %p149
        $region54: #{tpu_custom_call.1} parent=47 // pred_check_branch
          %403 = sbr.rel (%p401) target = $region56
        $region55: #{tpu_custom_call.1} parent=47 // pred_region
          %s404 = sand.u32 %s134, 1
          %s405 = scalar_lea.sflag [#allocation9], %s404
          %s406 = sand.u32 %s134, 1
          %s407 = smul.addr %s406, 8
          %s408 = scalar_lea.vmem [#allocation8], %s407
          %409 = dma.done %s405, 128
        $region56: #{tpu_custom_call.1} parent=47 // pred_fallthru
          _
      $region48: #{tpu_custom_call.1} parent=5 // pred_fallthru
        _
    $region6: #{tpu_custom_call.1} parent=1 // loop_footer
      %s26 = sadd.s32 1, %s22
    $region7: #{tpu_custom_call.1} parent=1 // loop_footer_branch
      %21 = sbr.rel target = $region3
    $region8: #{tpu_custom_call.1} parent=1 // loop_exit
      _
    %410 = vsyncpa [#allocation3], 1
    %s411 = scalar_lea.sflag [#allocation3], 1
    %412 = vsyncpa %s411, 1
    %413 = vsyncpa [#allocation6], 1
    %s414 = scalar_lea.sflag [#allocation6], 1
    %415 = vsyncpa %s414, 1
    %416 = vsyncpa [#allocation4], 1
    %s417 = scalar_lea.sflag [#allocation4], 1
    %418 = vsyncpa %s417, 1
    %419 = vsyncpa [#allocation9], 1
    %s420 = scalar_lea.sflag [#allocation9], 1
    %421 = vsyncpa %s420, 1

</llo_original>
